<compile_context>
chip_gen: v7x
topology: tpu7x:2x2x1
jax: 0.10.0
libtpu: 0.0.40
codegen_flags: <defaults>
</compile_context>

<pallas_src>
import functools

import numpy as np
import jax
import jax.numpy as jnp
from jax import lax
from jax.experimental import pallas as pl
from jax.experimental.pallas import tpu as pltpu


try:  # per-core VMEM capacity (v5e/v6e: 128 MiB, v7x: 64 MiB)
    _VMEM_CAP = int(pltpu.get_tpu_info().vmem_capacity_bytes)
except Exception:  # conservative fallback if the query is unavailable
    _VMEM_CAP = 64 << 20


def _round_up(x, m):
    return -(-x // m) * m


def _row_granule(itemsize):
    # sublane packing: f32 -> 8 rows/vreg, bf16 -> 16, fp8/int8 -> 32
    if itemsize >= 4:
        return 8
    if itemsize == 2:
        return 16
    return 32


def _pick_batch_tile(batch, d, in_itemsize, vmem_limit_bytes):
    """Largest batch tile whose *total* VMEM residency fits the limit.

    Per-batch-row residency of the crop-grid kernel (bytes):
      student input   2 buffers x 1 x D x itemsize
      teacher input   2 buffers x 2 x D x itemsize
      q scratch       2 x D x 4 (f32)
      f32 temporaries ~5 x D x 4   (worst step = teacher softmax)
    The result is a multiple of the sublane granule, capped so the batch
    ("parallel") axis yields >= 2 grid tiles (keeps v7x's second TensorCore
    busy; negligible cost on single-core v5e/v6e), preferring a tile that
    divides the batch evenly; otherwise the last tile is masked in-kernel.
    """
    granule = _row_granule(in_itemsize)
    if batch <= granule:
        return batch
    per_row = 6 * d * in_itemsize + (2 + 5) * d * 4
    fixed = 4 * d * 4 + 4 * 128 * 4           # center (x2 buf) + small outputs
    budget = max(int(0.9 * vmem_limit_bytes) - fixed, per_row * granule)
    cap = max(granule, (budget // per_row) // granule * granule)
    cap = min(cap, _round_up(-(-batch // 2), granule))       # >= 2 grid tiles
    for tb in range(cap, granule - 1, -granule):             # prefer even split
        if batch % tb == 0:
            return tb
    return cap                                               # masked last tile


def _dino_loss_kernel(inv_temp_ref, student_ref, teacher_ref, center_ref,
                      loss_ref, tsum_ref, q_ref, *,
                      inv_student_temp, rows_per_tile, rows_total, needs_mask):
    """One (batch-tile, crop) grid step of the DINO loss.

    inv_temp_ref : SMEM (1,)            1 / teacher_temp for this epoch
    student_ref  : VMEM (1, TB, D)      logits of crop v for this batch tile
    teacher_ref  : VMEM (2, TB, D)      teacher logits (both chunks); same
                                        block across the crop axis -> fetched
                                        once per batch tile
    center_ref   : VMEM (1, D)          current EMA center
    loss_ref     : VMEM (1, 1, 128)     per-tile loss accumulator (lane bcast)
    tsum_ref     : VMEM (1, 1, D)       per-tile raw teacher row-sum
    q_ref        : VMEM (2, TB, D) f32  cached teacher softmax (scratch)
    """
    i = pl.program_id(0)
    v = pl.program_id(1)
    inv_temp = inv_temp_ref[0]

    if needs_mask:  # static Python flag: only traced when batch % tile != 0
        row_ids = lax.broadcasted_iota(jnp.int32, (rows_per_tile, 1), 0)
        row_mask = row_ids < (rows_total - i * rows_per_tile)      # (TB, 1)
    else:
        row_mask = None

    # --- once per batch tile: teacher softmax -> scratch, raw teacher sum,
    #     zero the loss accumulator ---
    @pl.when(v == 0)
    def _():
        t = teacher_ref[...].astype(jnp.float32)                   # (2, TB, D)
        c = center_ref[...].astype(jnp.float32)                    # (1, D)
        tl = (t - c) * inv_temp
        tl = tl - jnp.max(tl, axis=-1, keepdims=True)
        te = jnp.exp(tl)
        q_ref[...] = te * pl.reciprocal(
            jnp.sum(te, axis=-1, keepdims=True), approx=False)
        t_sum = t if row_mask is None else jnp.where(row_mask, t, 0.0)
        tsum_ref[...] = jnp.sum(t_sum, axis=(0, 1)).reshape(1, 1, -1)
        loss_ref[...] = jnp.zeros_like(loss_ref)

    # --- every crop step: cross-entropy against the cached teacher softmax.
    # Crop 0 pairs with teacher chunk 1, crop 1 with chunk 0, crops >= 2 with
    # both chunks (the PyTorch "v != iq" double loop, collapsed). ---
    a0 = (v != 0).astype(jnp.float32)
    a1 = (v != 1).astype(jnp.float32)
    w = a0 * q_ref[0] + a1 * q_ref[1]                              # (TB, D)
    n_teachers = a0 + a1

    s = student_ref[0].astype(jnp.float32) * inv_student_temp      # (TB, D)
    s_shift = s - jnp.max(s, axis=-1, keepdims=True)
    log_z = jnp.log(jnp.sum(jnp.exp(s_shift), axis=-1, keepdims=True))  # (TB,1)
    cross = jnp.sum(w * s_shift, axis=-1, keepdims=True)                # (TB,1)
    contrib = n_teachers * log_z - cross                                # (TB,1)
    if row_mask is not None:
        contrib = jnp.where(row_mask, contrib, 0.0)
    loss_ref[...] += jnp.broadcast_to(jnp.sum(contrib), loss_ref.shape)


class DINOLossPallas:
    """Pallas-TPU implementation of DINOLoss.forward (incl. update_center)."""

    def __init__(self, out_dim, ncrops, warmup_teacher_temp, teacher_temp,
                 warmup_teacher_temp_epochs, nepochs,
                 student_temp=0.1, center_momentum=0.9, batch_tile=None):
        self.out_dim = out_dim
        self.ncrops = ncrops
        self.student_temp = student_temp
        self.center_momentum = center_momentum
        self.batch_tile = batch_tile
        self.center = jnp.zeros((1, out_dim), jnp.float32)
        self.teacher_temp_schedule = np.concatenate((
            np.linspace(warmup_teacher_temp, teacher_temp,
                        warmup_teacher_temp_epochs),
            np.ones(nepochs - warmup_teacher_temp_epochs) * teacher_temp,
        )).astype(np.float32)

    def __call__(self, student_output, teacher_output, epoch):
        # glue: schedule lookup is host-side; temp crosses as a device scalar
        temp = float(self.teacher_temp_schedule[epoch])
        inv_temp = jnp.asarray([1.0 / temp], jnp.float32)

        n_student, d = student_output.shape
        n_teacher, d_t = teacher_output.shape
        assert d == d_t == self.out_dim
        assert n_student % self.ncrops == 0 and n_teacher % 2 == 0
        batch = n_student // self.ncrops
        assert n_teacher == 2 * batch

        # Crop / chunk index becomes a leading axis: free leading-axis
        # indexing in the kernel, contiguous reshape, no unaligned row slices.
        student = student_output.reshape(self.ncrops, batch, d)
        teacher = teacher_output.reshape(2, batch, d)

        in_itemsize = int(student_output.dtype.itemsize)
        vmem_limit = min(int(0.75 * _VMEM_CAP), 100 << 20)

        if self.batch_tile is not None:
            tb = min(int(self.batch_tile), batch)
            assert tb == batch or tb % 8 == 0, \
                "batch_tile must be a multiple of 8 or cover the full batch"
        else:
            tb = _pick_batch_tile(batch, d, in_itemsize, vmem_limit)
        num_tiles = int(pl.cdiv(batch, tb))
        needs_mask = (batch % tb) != 0

        n_terms = sum(1 for iq in range(2) for v in range(self.ncrops)
                      if v != iq)

        kernel = functools.partial(
            _dino_loss_kernel,
            inv_student_temp=1.0 / self.student_temp,
            rows_per_tile=tb,
            rows_total=batch,
            needs_mask=needs_mask,
        )

        in_bytes = ((n_student + n_teacher) * d * in_itemsize + d * 4)
        out_bytes = num_tiles * (128 + d) * 4
        cost = pl.CostEstimate(
            flops=int((2 * 8 + self.ncrops * 8) * batch * d),
            transcendentals=int((self.ncrops + 2) * batch * d
                                + (self.ncrops + 2) * batch),
            bytes_accessed=int(in_bytes + out_bytes),
        )

        loss_parts, tsum_parts = pl.pallas_call(
            kernel,
            grid=(num_tiles, self.ncrops),
            out_shape=(
                jax.ShapeDtypeStruct((num_tiles, 1, 128), jnp.float32),
                jax.ShapeDtypeStruct((num_tiles, 1, d), jnp.float32),
            ),
            in_specs=[
                pl.BlockSpec(memory_space=pltpu.SMEM),                 # 1/temp
                pl.BlockSpec((1, tb, d), lambda i, v: (v, i, 0)),      # student
                pl.BlockSpec((2, tb, d), lambda i, v: (0, i, 0)),      # teacher
                pl.BlockSpec((1, d), lambda i, v: (0, 0)),             # center
            ],
            out_specs=(
                pl.BlockSpec((1, 1, 128), lambda i, v: (i, 0, 0)),
                pl.BlockSpec((1, 1, d), lambda i, v: (i, 0, 0)),
            ),
            scratch_shapes=[pltpu.VMEM((2, tb, d), jnp.float32)],      # q cache
            compiler_params=pltpu.CompilerParams(
                dimension_semantics=("parallel", "arbitrary"),
                vmem_limit_bytes=vmem_limit,
            ),
            cost_estimate=cost,
        )(inv_temp, student, teacher, self.center)

        loss = jnp.sum(loss_parts[:, 0, 0]) / jnp.float32(n_terms * batch)

        # EMA center update on the kernel-reduced teacher row-sum (O(D) glue).
        # TODO(synk): dist.all_reduce across data-parallel replicas is not
        # modeled; the center EMA below assumes world_size == 1.
        batch_center = (jnp.sum(tsum_parts[:, 0, :], axis=0, keepdims=True)
                        / jnp.float32(n_teacher))
        self.center = (self.center * self.center_momentum
                       + batch_center * (1.0 - self.center_momentum))
        return loss


def _reference(student_output, teacher_output, center, temp, ncrops,
               student_temp):
    s = np.asarray(student_output, np.float64) / student_temp
    t = np.asarray(teacher_output, np.float64)
    c = np.asarray(center, np.float64)
    tl = (t - c) / temp
    tl = tl - tl.max(-1, keepdims=True)
    te = np.exp(tl)
    t_soft = te / te.sum(-1, keepdims=True)
    sl = s - s.max(-1, keepdims=True)
    s_logsm = sl - np.log(np.exp(sl).sum(-1, keepdims=True))
    batch = s.shape[0] // ncrops
    total, n = 0.0, 0
    for iq in range(2):
        q = t_soft[iq * batch:(iq + 1) * batch]
        for v in range(ncrops):
            if v == iq:
                continue
            total += np.sum(-q * s_logsm[v * batch:(v + 1) * batch],
                            axis=-1).mean()
            n += 1
    return total / n


if __name__ == "__main__":
    out_dim = 256      # feature dim (lane axis)
    ncrops = 4
    batch = 16         # picker caps the tile at 8 -> 2 batch tiles x 4 crops
    epoch = 3

    loss_mod = DINOLossPallas(
        out_dim=out_dim, ncrops=ncrops,
        warmup_teacher_temp=0.04, teacher_temp=0.07,
        warmup_teacher_temp_epochs=5, nepochs=20,
        student_temp=0.1, center_momentum=0.9,
    )
    # deterministic non-zero center to exercise centering
    loss_mod.center = 0.01 * jnp.arange(out_dim, dtype=jnp.float32).reshape(
        1, out_dim)

    key = jax.random.PRNGKey(0)
    k1, k2 = jax.random.split(key)
    student_output = jax.random.normal(k1, (ncrops * batch, out_dim),
                                       jnp.float32)
    teacher_output = jax.random.normal(k2, (2 * batch, out_dim), jnp.float32)

    center_before = np.asarray(loss_mod.center)   # snapshot before EMA update
    loss = loss_mod(student_output, teacher_output, epoch)
    loss = jax.block_until_ready(loss)
    new_center = np.asarray(jax.block_until_ready(loss_mod.center))

    temp = float(loss_mod.teacher_temp_schedule[epoch])
    ref_loss = _reference(student_output, teacher_output, center_before, temp,
                          ncrops, loss_mod.student_temp)
    ref_center = (center_before * 0.9
                  + np.asarray(teacher_output, np.float64).sum(0, keepdims=True)
                  / teacher_output.shape[0] * 0.1)
    np.testing.assert_allclose(float(loss), ref_loss, rtol=2e-3, atol=2e-3)
    np.testing.assert_allclose(new_center, ref_center, rtol=1e-4, atol=1e-5)

    # --- second run: bf16 inputs + batch not a multiple of the tile
    #     (exercises the masked partial last tile and the dtype-aware picker)
    batch2 = 20
    loss_mod2 = DINOLossPallas(
        out_dim=out_dim, ncrops=ncrops,
        warmup_teacher_temp=0.04, teacher_temp=0.07,
        warmup_teacher_temp_epochs=5, nepochs=20,
        student_temp=0.1, center_momentum=0.9,
    )
    loss_mod2.center = 0.005 * jnp.arange(out_dim, dtype=jnp.float32).reshape(
        1, out_dim)
    k3, k4 = jax.random.split(jax.random.PRNGKey(1))
    s2_bf16 = jax.random.normal(k3, (ncrops * batch2, out_dim),
                                jnp.float32).astype(jnp.bfloat16)
    t2_bf16 = jax.random.normal(k4, (2 * batch2, out_dim),
                                jnp.float32).astype(jnp.bfloat16)
    c2_before = np.asarray(loss_mod2.center)
    loss2 = jax.block_until_ready(loss_mod2(s2_bf16, t2_bf16, epoch))
    ref2 = _reference(np.asarray(s2_bf16.astype(jnp.float32)),
                      np.asarray(t2_bf16.astype(jnp.float32)),
                      c2_before, temp, ncrops, loss_mod2.student_temp)
    np.testing.assert_allclose(float(loss2), ref2, rtol=1e-2, atol=1e-2)

    print("KERNEL_OK")
</pallas_src>

<mosaic_0001>
module attributes {stable_mosaic.version = 11 : i64} {
  func.func @_dino_loss_kernel(%arg0: i32, %arg1: i32, %arg2: memref<1xf32, #tpu.memory_space<smem>>, %arg3: memref<1x8x256xf32, #tpu.memory_space<vmem>>, %arg4: memref<2x8x256xf32, #tpu.memory_space<vmem>>, %arg5: memref<1x256xf32, #tpu.memory_space<vmem>>, %arg6: memref<1x1x128xf32, #tpu.memory_space<vmem>>, %arg7: memref<1x1x256xf32, #tpu.memory_space<vmem>>, %arg8: memref<2x8x256xf32, #tpu.memory_space<vmem>>) attributes {dimension_semantics = [#tpu.dimension_semantics<parallel>, #tpu.dimension_semantics<arbitrary>], iteration_bounds = array<i64: 2, 4>, scalar_prefetch = 0 : i64, scratch_operands = 1 : i64, tpu.core_type = #tpu.core_type<tc>, window_params = [{transform_indices = @transform_0, window_bounds = array<i64: 1>}, {transform_indices = @transform_1, window_bounds = array<i64: 1, 8, 256>}, {transform_indices = @transform_2, window_bounds = array<i64: 2, 8, 256>}, {pipeline_mode = #tpu.pipeline_mode<synchronous>, transform_indices = @transform_3, window_bounds = array<i64: 1, 256>}, {transform_indices = @transform_4, window_bounds = array<i64: 1, 1, 128>}, {transform_indices = @transform_5, window_bounds = array<i64: 1, 1, 256>}]} {
    %c0 = arith.constant 0 : index
    %0 = memref.load %arg2[%c0] : memref<1xf32, #tpu.memory_space<smem>>
    %c0_i32 = arith.constant 0 : i32
    %1 = arith.cmpi eq, %arg1, %c0_i32 : i32
    %2 = arith.extui %1 : i1 to i32
    %c0_i32_0 = arith.constant 0 : i32
    %3 = arith.cmpi ne, %2, %c0_i32_0 : i32
    scf.if %3 {
      %c0_20 = arith.constant 0 : index
      %c0_21 = arith.constant 0 : index
      %c0_22 = arith.constant 0 : index
      %46 = vector.load %arg4[%c0_20, %c0_21, %c0_22] : memref<2x8x256xf32, #tpu.memory_space<vmem>>, vector<2x8x256xf32>
      %c0_23 = arith.constant 0 : index
      %c0_24 = arith.constant 0 : index
      %47 = vector.load %arg5[%c0_23, %c0_24] : memref<1x256xf32, #tpu.memory_space<vmem>>, vector<1x256xf32>
      %48 = vector.shape_cast %47 : vector<1x256xf32> to vector<1x1x256xf32>
      %49 = vector.broadcast %48 : vector<1x1x256xf32> to vector<2x8x256xf32>
      %50 = arith.subf %46, %49 : vector<2x8x256xf32>
      %51 = vector.broadcast %0 : f32 to vector<2x8x256xf32>
      %52 = arith.mulf %50, %51 : vector<2x8x256xf32>
      %cst_25 = arith.constant dense<0xFF800000> : vector<2x8xf32>
      %53 = vector.multi_reduction <maximumf>, %52, %cst_25 [2] : vector<2x8x256xf32> to vector<2x8xf32>
      %54 = vector.shape_cast %53 : vector<2x8xf32> to vector<2x8x1xf32>
      %55 = vector.broadcast %54 : vector<2x8x1xf32> to vector<2x8x256xf32>
      %56 = arith.subf %52, %55 : vector<2x8x256xf32>
      %57 = math.exp %56 : vector<2x8x256xf32>
      %cst_26 = arith.constant dense<0.000000e+00> : vector<2x8xf32>
      %58 = vector.multi_reduction <add>, %57, %cst_26 [2] : vector<2x8x256xf32> to vector<2x8xf32>
      %59 = vector.shape_cast %58 : vector<2x8xf32> to vector<2x8x1xf32>
      %60 = tpu.reciprocal %59 : vector<2x8x1xf32> -> vector<2x8x1xf32>
      %61 = vector.broadcast %60 : vector<2x8x1xf32> to vector<2x8x256xf32>
      %62 = arith.mulf %57, %61 : vector<2x8x256xf32>
      %c0_27 = arith.constant 0 : index
      %c0_28 = arith.constant 0 : index
      %c0_29 = arith.constant 0 : index
      %63 = vector.load %arg8[%c0_27, %c0_28, %c0_29] : memref<2x8x256xf32, #tpu.memory_space<vmem>>, vector<2x8x256xf32>
      tpu.vector_store %arg8[%c0_27, %c0_28, %c0_29], %62 {strides = array<i32>} : memref<2x8x256xf32, #tpu.memory_space<vmem>>, vector<2x8x256xf32>,
      %cst_30 = arith.constant dense<0.000000e+00> : vector<256xf32>
      %64 = vector.multi_reduction <add>, %46, %cst_30 [0, 1] : vector<2x8x256xf32> to vector<256xf32>
      %65 = vector.shape_cast %64 : vector<256xf32> to vector<1x1x256xf32>
      %c0_31 = arith.constant 0 : index
      %c0_32 = arith.constant 0 : index
      %c0_33 = arith.constant 0 : index
      %66 = vector.load %arg7[%c0_31, %c0_32, %c0_33] : memref<1x1x256xf32, #tpu.memory_space<vmem>>, vector<1x1x256xf32>
      tpu.vector_store %arg7[%c0_31, %c0_32, %c0_33], %65 {strides = array<i32>} : memref<1x1x256xf32, #tpu.memory_space<vmem>>, vector<1x1x256xf32>,
      %cst_34 = arith.constant 0.000000e+00 : f32
      %67 = vector.broadcast %cst_34 : f32 to vector<1x1x128xf32>
      %c0_35 = arith.constant 0 : index
      %c0_36 = arith.constant 0 : index
      %c0_37 = arith.constant 0 : index
      %68 = vector.load %arg6[%c0_35, %c0_36, %c0_37] : memref<1x1x128xf32, #tpu.memory_space<vmem>>, vector<1x1x128xf32>
      tpu.vector_store %arg6[%c0_35, %c0_36, %c0_37], %67 {strides = array<i32>} : memref<1x1x128xf32, #tpu.memory_space<vmem>>, vector<1x1x128xf32>,
    } else {
    }
    %c0_i32_1 = arith.constant 0 : i32
    %4 = arith.cmpi ne, %arg1, %c0_i32_1 : i32
    %5 = arith.extui %4 : i1 to i32
    %6 = arith.sitofp %5 : i32 to f32
    %c1_i32 = arith.constant 1 : i32
    %7 = arith.cmpi ne, %arg1, %c1_i32 : i32
    %8 = arith.extui %7 : i1 to i32
    %9 = arith.sitofp %8 : i32 to f32
    %c0_2 = arith.constant 0 : index
    %c0_3 = arith.constant 0 : index
    %c0_4 = arith.constant 0 : index
    %10 = vector.load %arg8[%c0_2, %c0_3, %c0_4] : memref<2x8x256xf32, #tpu.memory_space<vmem>>, vector<1x8x256xf32>
    %11 = vector.shape_cast %10 : vector<1x8x256xf32> to vector<8x256xf32>
    %12 = vector.broadcast %6 : f32 to vector<8x256xf32>
    %13 = arith.mulf %12, %11 : vector<8x256xf32>
    %c1 = arith.constant 1 : index
    %c0_5 = arith.constant 0 : index
    %c0_6 = arith.constant 0 : index
    %14 = vector.load %arg8[%c1, %c0_5, %c0_6] : memref<2x8x256xf32, #tpu.memory_space<vmem>>, vector<1x8x256xf32>
    %15 = vector.shape_cast %14 : vector<1x8x256xf32> to vector<8x256xf32>
    %16 = vector.broadcast %9 : f32 to vector<8x256xf32>
    %17 = arith.mulf %16, %15 : vector<8x256xf32>
    %18 = arith.addf %13, %17 : vector<8x256xf32>
    %19 = arith.addf %6, %9 : f32
    %c0_7 = arith.constant 0 : index
    %c0_8 = arith.constant 0 : index
    %c0_9 = arith.constant 0 : index
    %20 = vector.load %arg3[%c0_7, %c0_8, %c0_9] : memref<1x8x256xf32, #tpu.memory_space<vmem>>, vector<1x8x256xf32>
    %21 = vector.shape_cast %20 : vector<1x8x256xf32> to vector<8x256xf32>
    %cst = arith.constant 1.000000e+01 : f32
    %22 = vector.broadcast %cst : f32 to vector<8x256xf32>
    %23 = arith.mulf %21, %22 : vector<8x256xf32>
    %cst_10 = arith.constant dense<0xFF800000> : vector<8xf32>
    %24 = vector.multi_reduction <maximumf>, %23, %cst_10 [1] : vector<8x256xf32> to vector<8xf32>
    %25 = vector.shape_cast %24 : vector<8xf32> to vector<8x1xf32>
    %26 = vector.broadcast %25 : vector<8x1xf32> to vector<8x256xf32>
    %27 = arith.subf %23, %26 : vector<8x256xf32>
    %28 = math.exp %27 : vector<8x256xf32>
    %cst_11 = arith.constant dense<0.000000e+00> : vector<8xf32>
    %29 = vector.multi_reduction <add>, %28, %cst_11 [1] : vector<8x256xf32> to vector<8xf32>
    %30 = vector.shape_cast %29 : vector<8xf32> to vector<8x1xf32>
    %31 = math.log %30 : vector<8x1xf32>
    %32 = arith.mulf %18, %27 : vector<8x256xf32>
    %cst_12 = arith.constant dense<0.000000e+00> : vector<8xf32>
    %33 = vector.multi_reduction <add>, %32, %cst_12 [1] : vector<8x256xf32> to vector<8xf32>
    %34 = vector.shape_cast %33 : vector<8xf32> to vector<8x1xf32>
    %35 = vector.broadcast %19 : f32 to vector<8x1xf32>
    %36 = arith.mulf %35, %31 : vector<8x1xf32>
    %37 = arith.subf %36, %34 : vector<8x1xf32>
    %c0_13 = arith.constant 0 : index
    %c0_14 = arith.constant 0 : index
    %c0_15 = arith.constant 0 : index
    %38 = vector.load %arg6[%c0_13, %c0_14, %c0_15] : memref<1x1x128xf32, #tpu.memory_space<vmem>>, vector<1x1x128xf32>
    %39 = vector.shape_cast %37 : vector<8x1xf32> to vector<1x8x1xf32>
    %cst_16 = arith.constant dense<0.000000e+00> : vector<1xf32>
    %40 = vector.multi_reduction <add>, %39, %cst_16 [1, 2] : vector<1x8x1xf32> to vector<1xf32>
    %41 = vector.shape_cast %40 : vector<1xf32> to vector<1x1x1xf32>
    %42 = vector.extract %41[0, 0, 0] : f32 from vector<1x1x1xf32>
    %43 = vector.broadcast %42 : f32 to vector<1x1x128xf32>
    %44 = arith.addf %38, %43 : vector<1x1x128xf32>
    %c0_17 = arith.constant 0 : index
    %c0_18 = arith.constant 0 : index
    %c0_19 = arith.constant 0 : index
    %45 = vector.load %arg6[%c0_17, %c0_18, %c0_19] : memref<1x1x128xf32, #tpu.memory_space<vmem>>, vector<1x1x128xf32>
    tpu.vector_store %arg6[%c0_17, %c0_18, %c0_19], %44 {strides = array<i32>} : memref<1x1x128xf32, #tpu.memory_space<vmem>>, vector<1x1x128xf32>,
    return
  }
  func.func @transform_0(%arg0: i32, %arg1: i32) -> i32 {
    %c0_i32 = arith.constant 0 : i32
    %c0_i32_0 = arith.constant 0 : i32
    return %c0_i32 : i32
  }
  func.func @transform_1(%arg0: i32, %arg1: i32) -> (i32, i32, i32) {
    %c0_i32 = arith.constant 0 : i32
    %c0_i32_0 = arith.constant 0 : i32
    return %arg1, %arg0, %c0_i32 : i32, i32, i32
  }
  func.func @transform_2(%arg0: i32, %arg1: i32) -> (i32, i32, i32) {
    %c0_i32 = arith.constant 0 : i32
    %c0_i32_0 = arith.constant 0 : i32
    %c0_i32_1 = arith.constant 0 : i32
    return %c0_i32, %arg0, %c0_i32_0 : i32, i32, i32
  }
  func.func @transform_3(%arg0: i32, %arg1: i32) -> (i32, i32) {
    %c0_i32 = arith.constant 0 : i32
    %c0_i32_0 = arith.constant 0 : i32
    %c0_i32_1 = arith.constant 0 : i32
    return %c0_i32, %c0_i32_0 : i32, i32
  }
  func.func @transform_4(%arg0: i32, %arg1: i32) -> (i32, i32, i32) {
    %c0_i32 = arith.constant 0 : i32
    %c0_i32_0 = arith.constant 0 : i32
    %c0_i32_1 = arith.constant 0 : i32
    return %arg0, %c0_i32, %c0_i32_0 : i32, i32, i32
  }
  func.func @transform_5(%arg0: i32, %arg1: i32) -> (i32, i32, i32) {
    %c0_i32 = arith.constant 0 : i32
    %c0_i32_0 = arith.constant 0 : i32
    %c0_i32_1 = arith.constant 0 : i32
    return %arg0, %c0_i32, %c0_i32_0 : i32, i32, i32
  }
}

</mosaic_0001>

<llo_original>
// kernel: tpu_custom_call.1
$region0: #{tpu_custom_call.1}
  #allocation0 [shape = 'u32[]', space=smem, size = 0x4, offset = 0x4, fixed_abs, tag = 'smem constant byte address 0x4 - core index']
  #allocation1 [shape = 'u32[144,128]{1,0:T(1,128)}', space=vmem, size = 0x12000, scoped, tag = 'internal scratch']
  #allocation2 [shape = 'f32[2,8,256]{2,1,0:T(8,128)}', space=vmem, size = 0x4000, scoped, tag = 'scratch operand']
  #allocation3 [shape = 'f32[1]{0:T(128)S(6)}', space=smem, size = 0x200, scoped, tag = 'scoped memory for tpu_custom_call.1']
  %s0 = inlined_call_operand.<no memory space> [shape: f32[1], index: 0, kind: input, shape index: {}]
  %s1 = inlined_call_operand.hbm [shape: f32[4,16,256], index: 1, kind: input, shape index: {}]
  %s2 = inlined_call_operand.hbm [shape: f32[2,16,256], index: 2, kind: input, shape index: {}]
  %s3 = inlined_call_operand.vmem [shape: f32[1,256], index: 3, kind: input, shape index: {}]
  %s4 = inlined_call_operand.hbm [shape: f32[2,1,128], index: 4, kind: output, shape index: {0}]
  %s5 = inlined_call_operand.hbm [shape: f32[2,1,256], index: 5, kind: output, shape index: {1}]
  %6 = xla_tuple %s4, %s5
  %s7 = sld [smem:[#allocation0]]
  $region69: #{tpu_custom_call.1} parent=0
    _
  %s9 = ssub.s32 1, %s7
  %s10 = scalar_select 0, %s9, %s7
  %11 = sst [smem:[#allocation3]] %s0
  $region1: #{tpu_custom_call.1} parent=0
    #allocation4 [shape = 'u8[16384]{0}', space=vmem, size = 0x4000, scoped, tag = 'input window, operand 1']
    #allocation5 [shape = 's32[2]{0}', space=sflag, size = 0x8, scoped, tag = 'scoped memory for tpu_custom_call.1']
    #allocation6 [shape = 's32[2]{0}', space=sflag, size = 0x8, scoped, tag = 'scoped memory for tpu_custom_call.1']
    #allocation7 [shape = 'u8[32768]{0}', space=vmem, size = 0x8000, scoped, tag = 'input window, operand 2']
    #allocation8 [shape = 's32[2]{0}', space=sflag, size = 0x8, scoped, tag = 'scoped memory for tpu_custom_call.1']
    #allocation9 [shape = 'u8[1024]{0}', space=vmem, size = 0x400, scoped, tag = 'output window, operand 0']
    #allocation10 [shape = 'u8[2048]{0}', space=vmem, size = 0x800, scoped, tag = 'output window, operand 1']
    #allocation11 [shape = 's32[2]{0}', space=sflag, size = 0x8, scoped, tag = 'scoped memory for tpu_custom_call.1']
    %12 = vsyncpa [#allocation5], 0
    %s13 = scalar_lea.sflag [#allocation5], 1
    %14 = vsyncpa %s13, 0
    %15 = vsyncpa [#allocation8], 0
    %s16 = scalar_lea.sflag [#allocation8], 1
    %17 = vsyncpa %s16, 0
    %18 = vsyncpa [#allocation6], 0
    %s19 = scalar_lea.sflag [#allocation6], 1
    %20 = vsyncpa %s19, 0
    %21 = vsyncpa [#allocation11], 0
    %s22 = scalar_lea.sflag [#allocation11], 1
    %23 = vsyncpa %s22, 0
    loop: start=0, step=1, limit=10
    $region2: #{tpu_custom_call.1} parent=1 // loop_pre_header
      _
    $region3: #{tpu_custom_call.1} parent=1 // loop_header
      %s25 = sphi 0, %s29
      %p26 = scmp.ge.s32.totalorder %s25, 10
      %s32 = sphi 0, %s44
      %s33 = sphi 0, %s40
      %s34 = sphi 0, %s32
      %s35 = sphi 0, %s33
      %s36 = sphi 0, %s34
      %s37 = sphi 0, %s35
      %s45 = sphi 0, %s45
      %s47 = sphi 0, %s45
      %s48 = sphi 0, %s47
      %s62 = sphi 0, %s48
      %s70 = sphi 0, %s72
      %s73 = sphi 0, %s70
      %s74 = sphi 0, %s73
      %s90 = sphi 0, %s74
      %s96 = sphi 0, %s98
      %s99 = sphi 0, %s96
      %s100 = sphi 0, %s99
      %s116 = sphi 0, %s100
      %s120 = sphi 0, %s120
      %s122 = sphi 0, %s120
      %s123 = sphi 0, %s122
      %s137 = sphi 0, %s123
      %s143 = sphi 0, %s145
      %s146 = sphi 0, %s143
      %s147 = sphi 0, %s146
      %s163 = sphi 0, %s147
      %s169 = sphi 0, %s171
      %s172 = sphi 0, %s169
      %s173 = sphi 0, %s172
      %s189 = sphi 0, %s173
    $region4: #{tpu_custom_call.1} parent=1 // loop_header_branch
      %28 = sbr.rel (%p26) target = $region8
    $region5: #{tpu_custom_call.1} parent=1 // loop_body
      %s30 = ssub.s32 %s25, 1
      %s31 = ssub.s32 %s25, 2
      %s38 = sadd.s32 1, %s33
      %p39 = scmp.ge.s32.totalorder %s38, 4
      %s40 = scalar_select %p39, 0, %s38
      %s41 = sadd.s32 1, %s32
      %s42 = scalar_select %p39, %s41, %s32
      %p43 = scmp.ge.s32.totalorder %s42, 2
      %s44 = scalar_select %p43, 0, %s42
      %s46 = sadd.s32 %s45, 1
      %p49 = scmp.eq.s32.totalorder %s25, 7
      %p50 = scmp.ne.s32.totalorder %s45, %s47
      %p51 = scmp.eq.s32.totalorder %s25, 0
      %p52 = por %p50, %p51
      %p53 = scmp.ne.s32.totalorder %s45, %s47
      %p54 = scmp.eq.s32.totalorder %s30, 7
      %p55 = por %p53, %p54
      %p56 = scmp.ne.s32.totalorder %s47, %s48
      %p57 = scmp.eq.s32.totalorder %s30, 0
      %p58 = por %p56, %p57
      %p59 = scmp.ne.s32.totalorder %s47, %s48
      %p60 = scmp.eq.s32.totalorder %s31, 7
      %p61 = por %p59, %p60
      %p63 = scmp.ne.s32.totalorder %s48, %s62
      %p64 = scmp.eq.s32.totalorder %s31, 0
      %p65 = por %p63, %p64
      %s66 = ssub.s32 %s33, %s40
      %s67 = ssub.s32 %s32, %s44
      %s68 = sor.u32 %s66, %s67
      %p69 = scmp.eq.s32.totalorder %s68, 0
      %s71 = sadd.s32 %s70, 1
      %s72 = scalar_select %p69, %s70, %s71
      %p75 = pneg %p69
      %p76 = scmp.eq.s32.totalorder %s25, 7
      %p77 = por %p75, %p76
      %p78 = scmp.ne.s32.totalorder %s70, %s73
      %p79 = scmp.eq.s32.totalorder %s25, 0
      %p80 = por %p78, %p79
      %p81 = scmp.ne.s32.totalorder %s70, %s73
      %p82 = scmp.eq.s32.totalorder %s30, 7
      %p83 = por %p81, %p82
      %p84 = scmp.ne.s32.totalorder %s73, %s74
      %p85 = scmp.eq.s32.totalorder %s30, 0
      %p86 = por %p84, %p85
      %p87 = scmp.ne.s32.totalorder %s73, %s74
      %p88 = scmp.eq.s32.totalorder %s31, 7
      %p89 = por %p87, %p88
      %p91 = scmp.ne.s32.totalorder %s74, %s90
      %p92 = scmp.eq.s32.totalorder %s31, 0
      %p93 = por %p91, %p92
      %s94 = ssub.s32 %s32, %s44
      %p95 = scmp.eq.s32.totalorder %s94, 0
      %s97 = sadd.s32 %s96, 1
      %s98 = scalar_select %p95, %s96, %s97
      %p101 = pneg %p95
      %p102 = scmp.eq.s32.totalorder %s25, 7
      %p103 = por %p101, %p102
      %p104 = scmp.ne.s32.totalorder %s96, %s99
      %p105 = scmp.eq.s32.totalorder %s25, 0
      %p106 = por %p104, %p105
      %p107 = scmp.ne.s32.totalorder %s96, %s99
      %p108 = scmp.eq.s32.totalorder %s30, 7
      %p109 = por %p107, %p108
      %p110 = scmp.ne.s32.totalorder %s99, %s100
      %p111 = scmp.eq.s32.totalorder %s30, 0
      %p112 = por %p110, %p111
      %p113 = scmp.ne.s32.totalorder %s99, %s100
      %p114 = scmp.eq.s32.totalorder %s31, 7
      %p115 = por %p113, %p114
      %p117 = scmp.ne.s32.totalorder %s100, %s116
      %p118 = scmp.eq.s32.totalorder %s31, 0
      %p119 = por %p117, %p118
      %s121 = sadd.s32 %s120, 1
      %p124 = scmp.eq.s32.totalorder %s25, 7
      %p125 = scmp.ne.s32.totalorder %s120, %s122
      %p126 = scmp.eq.s32.totalorder %s25, 0
      %p127 = por %p125, %p126
      %p128 = scmp.ne.s32.totalorder %s120, %s122
      %p129 = scmp.eq.s32.totalorder %s30, 7
      %p130 = por %p128, %p129
      %p131 = scmp.ne.s32.totalorder %s122, %s123
      %p132 = scmp.eq.s32.totalorder %s30, 0
      %p133 = por %p131, %p132
      %p134 = scmp.ne.s32.totalorder %s122, %s123
      %p135 = scmp.eq.s32.totalorder %s31, 7
      %p136 = por %p134, %p135
      %p138 = scmp.ne.s32.totalorder %s123, %s137
      %p139 = scmp.eq.s32.totalorder %s31, 0
      %p140 = por %p138, %p139
      %s141 = ssub.s32 %s32, %s44
      %p142 = scmp.eq.s32.totalorder %s141, 0
      %s144 = sadd.s32 %s143, 1
      %s145 = scalar_select %p142, %s143, %s144
      %p148 = pneg %p142
      %p149 = scmp.eq.s32.totalorder %s25, 7
      %p150 = por %p148, %p149
      %p151 = scmp.ne.s32.totalorder %s143, %s146
      %p152 = scmp.eq.s32.totalorder %s25, 0
      %p153 = por %p151, %p152
      %p154 = scmp.ne.s32.totalorder %s143, %s146
      %p155 = scmp.eq.s32.totalorder %s30, 7
      %p156 = por %p154, %p155
      %p157 = scmp.ne.s32.totalorder %s146, %s147
      %p158 = scmp.eq.s32.totalorder %s30, 0
      %p159 = por %p157, %p158
      %p160 = scmp.ne.s32.totalorder %s146, %s147
      %p161 = scmp.eq.s32.totalorder %s31, 7
      %p162 = por %p160, %p161
      %p164 = scmp.ne.s32.totalorder %s147, %s163
      %p165 = scmp.eq.s32.totalorder %s31, 0
      %p166 = por %p164, %p165
      %s167 = ssub.s32 %s32, %s44
      %p168 = scmp.eq.s32.totalorder %s167, 0
      %s170 = sadd.s32 %s169, 1
      %s171 = scalar_select %p168, %s169, %s170
      %p174 = pneg %p168
      %p175 = scmp.eq.s32.totalorder %s25, 7
      %p176 = por %p174, %p175
      %p177 = scmp.ne.s32.totalorder %s169, %s172
      %p178 = scmp.eq.s32.totalorder %s25, 0
      %p179 = por %p177, %p178
      %p180 = scmp.ne.s32.totalorder %s169, %s172
      %p181 = scmp.eq.s32.totalorder %s30, 7
      %p182 = por %p180, %p181
      %p183 = scmp.ne.s32.totalorder %s172, %s173
      %p184 = scmp.eq.s32.totalorder %s30, 0
      %p185 = por %p183, %p184
      %p186 = scmp.ne.s32.totalorder %s172, %s173
      %p187 = scmp.eq.s32.totalorder %s31, 7
      %p188 = por %p186, %p187
      %p190 = scmp.ne.s32.totalorder %s173, %s189
      %p191 = scmp.eq.s32.totalorder %s31, 0
      %p192 = por %p190, %p191
      %p193 = scmp.le.s32.totalorder 1, %s25
      %p194 = scmp.lt.s32.totalorder %s25, 9
      %p195 = pnand %p193, %p194
      %p196 = pneg %p195
      // Predicated region
      $region9: #{tpu_custom_call.1} parent=5 // pred_check
        _
      $region10: #{tpu_custom_call.1} parent=5 // pred_check_branch
        %198 = sbr.rel (%p195) target = $region12
      $region11: #{tpu_custom_call.1} parent=5 // pred_region
        %s199 = ssub.s32 %s25, 1
        // Predicated region
        $region13: #{tpu_custom_call.1} parent=11 // pred_check
          %p200 = pneg %p58
        $region14: #{tpu_custom_call.1} parent=11 // pred_check_branch
          %202 = sbr.rel (%p200) target = $region16
        $region15: #{tpu_custom_call.1} parent=11 // pred_region
          _
        $region16: #{tpu_custom_call.1} parent=11 // pred_fallthru
          _
        // Predicated region
        $region17: #{tpu_custom_call.1} parent=11 // pred_check
          %p203 = pneg %p133
        $region18: #{tpu_custom_call.1} parent=11 // pred_check_branch
          %205 = sbr.rel (%p203) target = $region20
        $region19: #{tpu_custom_call.1} parent=11 // pred_region
          _
        $region20: #{tpu_custom_call.1} parent=11 // pred_fallthru
          _
      $region12: #{tpu_custom_call.1} parent=5 // pred_fallthru
        _
      %p206 = scmp.lt.s32.totalorder %s25, 8
      // Predicated region
      $region21: #{tpu_custom_call.1} parent=5 // pred_check
        %p207 = pneg %p206
      $region22: #{tpu_custom_call.1} parent=5 // pred_check_branch
        %209 = sbr.rel (%p207) target = $region24
      $region23: #{tpu_custom_call.1} parent=5 // pred_region
        // Predicated region
        $region25: #{tpu_custom_call.1} parent=23 // pred_check
          %p210 = pneg %p80
        $region26: #{tpu_custom_call.1} parent=23 // pred_check_branch
          %212 = sbr.rel (%p210) target = $region28
        $region27: #{tpu_custom_call.1} parent=23 // pred_region
          %s213 = sand.u32 %s70, 1
          %s214 = scalar_lea.sflag [#allocation5], %s213
          %s215 = sand.u32 %s70, 1
          %s216 = smul.addr %s215, 16
          %s217 = scalar_lea.vmem [#allocation4], %s216
          %s219 = ssub.s32 256, 256
          %220 = vsyncadd %s214, %s219
          %s221 = smul.addr %s32, 2
          %s222 = smul.addr %s33, 4
          %s223 = sadd.s32 %s221, %s222
          %s224 = smul.addr %s223, 128
          %s225 = scalar_lea.hbm %s1, %s224
          %s227 = sshll.u32 %s217, 4
          %s228 = int_to_ptr.vmem [resolvable:$true] %s227
          %230 = dma.hbm_to_vmem [thread:$0]  %s225, 256, %s228, %s214
        $region28: #{tpu_custom_call.1} parent=23 // pred_fallthru
          _
        // Predicated region
        $region29: #{tpu_custom_call.1} parent=23 // pred_check
          %p231 = pneg %p106
        $region30: #{tpu_custom_call.1} parent=23 // pred_check_branch
          %233 = sbr.rel (%p231) target = $region32
        $region31: #{tpu_custom_call.1} parent=23 // pred_region
          %s234 = sand.u32 %s96, 1
          %s235 = scalar_lea.sflag [#allocation8], %s234
          %s236 = sand.u32 %s96, 1
          %s237 = smul.addr %s236, 32
          %s238 = scalar_lea.vmem [#allocation7], %s237
          %s240 = ssub.s32 512, 512
          %241 = vsyncadd %s235, %s240
          %s242 = smul.addr %s32, 2
          %s243 = smul.addr %s242, 128
          %s244 = scalar_lea.hbm %s2, %s243
          %s245 = sshll.u32 %s238, 4
          %s246 = int_to_ptr.vmem [resolvable:$true] %s245
          %251 = dma.hbm_to_vmem [thread:$0]  %s244, 512, %s246, %s235, 512, 256, 16
        $region32: #{tpu_custom_call.1} parent=23 // pred_fallthru
          _
      $region24: #{tpu_custom_call.1} parent=5 // pred_fallthru
        _
      %p252 = scmp.le.s32.totalorder 1, %s25
      %p253 = scmp.lt.s32.totalorder %s25, 9
      %p254 = pnand %p252, %p253
      %p255 = pneg %p254
      // Predicated region
      $region33: #{tpu_custom_call.1} parent=5 // pred_check
        _
      $region34: #{tpu_custom_call.1} parent=5 // pred_check_branch
        %257 = sbr.rel (%p254) target = $region36
      $region35: #{tpu_custom_call.1} parent=5 // pred_region
        %s258 = ssub.s32 %s25, 1
        %s259 = sand.u32 %s73, 1
        %s260 = scalar_lea.sflag [#allocation5], %s259
        %s261 = sand.u32 %s73, 1
        %s262 = smul.addr %s261, 16
        %s263 = scalar_lea.vmem [#allocation4], %s262
        // Predicated region
        $region37: #{tpu_custom_call.1} parent=35 // pred_check
          %p264 = pneg %p86
        $region38: #{tpu_custom_call.1} parent=35 // pred_check_branch
          %266 = sbr.rel (%p264) target = $region40
        $region39: #{tpu_custom_call.1} parent=35 // pred_region
          %267 = dma.done %s260, 256
        $region40: #{tpu_custom_call.1} parent=35 // pred_fallthru
          _
        %s268 = sand.u32 %s99, 1
        %s269 = scalar_lea.sflag [#allocation8], %s268
        %s270 = sand.u32 %s99, 1
        %s271 = smul.addr %s270, 32
        %s272 = scalar_lea.vmem [#allocation7], %s271
        // Predicated region
        $region41: #{tpu_custom_call.1} parent=35 // pred_check
          %p273 = pneg %p112
        $region42: #{tpu_custom_call.1} parent=35 // pred_check_branch
          %275 = sbr.rel (%p273) target = $region44
        $region43: #{tpu_custom_call.1} parent=35 // pred_region
          %276 = dma.done %s269, 512
        $region44: #{tpu_custom_call.1} parent=35 // pred_fallthru
          _
        %p277 = pneg %p58
        %p278 = pneg %p55
        %s279 = sand.u32 %s73, 1
        %s280 = scalar_lea.sflag [#allocation5], %s279
        %s281 = sand.u32 %s73, 1
        %s282 = smul.addr %s281, 16
        %s283 = scalar_lea.vmem [#allocation4], %s282
        %p284 = pneg %p86
        %p285 = pneg %p83
        %s286 = sand.u32 %s99, 1
        %s287 = scalar_lea.sflag [#allocation8], %s286
        %s288 = sand.u32 %s99, 1
        %s289 = smul.addr %s288, 32
        %s290 = scalar_lea.vmem [#allocation7], %s289
        %p291 = pneg %p112
        %p292 = pneg %p109
        %p293 = pneg %p133
        %p294 = pneg %p130
        %p295 = pneg %p159
        %p296 = pneg %p156
        %s297 = sand.u32 %s146, 1
        %s298 = scalar_lea.sflag [#allocation6], %s297
        %s299 = sand.u32 %s146, 1
        %s300 = scalar_lea.vmem [#allocation9], %s299
        %p301 = pneg %p185
        %p302 = pneg %p182
        %s303 = sand.u32 %s172, 1
        %s304 = scalar_lea.sflag [#allocation11], %s303
        %s305 = sand.u32 %s172, 1
        %s306 = smul.addr %s305, 2
        %s307 = scalar_lea.vmem [#allocation10], %s306
        %s308 = sld [smem:[#allocation3]]
        %p309 = scmp.eq.s32.totalorder %s35, 0
        // Predicated region
        $region45: #{tpu_custom_call.1} parent=35 // pred_check
          %p310 = pneg %p309
        $region46: #{tpu_custom_call.1} parent=35 // pred_check_branch
          %312 = sbr.rel (%p310) target = $region48
        $region47: #{tpu_custom_call.1} parent=35 // pred_region
          %v313 = vld [vmem:[%s272] sm:$0xff]
          %v314 = vld [vmem:[%s272 + $0x8] sm:$0xff]
          %v315 = vld [vmem:[%s272 + $0x10] sm:$0xff]
          %v316 = vld [vmem:[%s272 + $0x18] sm:$0xff]
          %v317 = vld [vmem:[%s3] sm:$0x3]
          %v319 = vlaneseq
          %v320 = vshrl.u32 %v319, 7
          %v321 = vsub.s32 0, %v320
          %v322 = vrot.slane %v317, %v321
          %v323 = vlaneseq
          %v324 = vshrl.u32 %v323, 7
          %v325 = vsub.s32 1, %v324
          %v326 = vrot.slane %v317, %v325
          %v329 = vsub.f32 %v313, %v322
          %v330 = vsub.f32 %v314, %v326
          %v331 = vsub.f32 %v315, %v322
          %v332 = vsub.f32 %v316, %v326
          %v333 = vstv %s308
          %v334 = vmul.f32 %v329, %v333
          %v335 = vmul.f32 %v330, %v333
          %v336 = vmul.f32 %v331, %v333
          %v337 = vmul.f32 %v332, %v333
          %v338 = vmax.f32 %v334, %v335
          %339 = vmax.xlane.f32.xlu0 %v338
          %v340 = vpop.xlane.xlu0 %339
          %v341 = vmax.f32 %v336, %v337
          %342 = vmax.xlane.f32.xlu0 %v341
          %v343 = vpop.xlane.xlu0 %342
          %v344 = vsub.f32 %v334, %v340
          %v345 = vsub.f32 %v335, %v340
          %v346 = vsub.f32 %v336, %v343
          %v347 = vsub.f32 %v337, %v343
          %v348 = vmul.f32 %v344, 1.442695
          %v349 = vpow.pop %v348
          %v350 = vmul.f32 %v345, 1.442695
          %v351 = vpow.pop %v350
          %v352 = vmul.f32 %v346, 1.442695
          %v353 = vpow.pop %v352
          %v354 = vmul.f32 %v347, 1.442695
          %v355 = vpow.pop %v354
          %v356 = vadd.f32 %v349, %v351
          %357 = vadd.xlane.f32.xlu0 %v356
          %v358 = vpop.xlane.xlu0 %357
          %v359 = vadd.f32 %v353, %v355
          %360 = vadd.xlane.f32.xlu0 %v359
          %v361 = vpop.xlane.xlu0 %360
          %v362 = vrcp.pop %v358
          %v363 = vrcp.pop %v361
          %v364 = vmul.f32 %v349, %v362
          %v365 = vmul.f32 %v351, %v362
          %v366 = vmul.f32 %v353, %v363
          %v367 = vmul.f32 %v355, %v363
          %368 = vst [vmem:[#allocation2] sm:$0xff] %v364
          %369 = vst [vmem:[#allocation2 + $0x8] sm:$0xff] %v365
          %370 = vst [vmem:[#allocation2 + $0x10] sm:$0xff] %v366
          %371 = vst [vmem:[#allocation2 + $0x18] sm:$0xff] %v367
          %v372 = vadd.f32 %v313, %v315
          %v373 = vrot.slane %v372, 4
          %v374 = vadd.f32 %v372, %v373
          %v375 = vrot.slane %v374, 2
          %v376 = vadd.f32 %v374, %v375
          %v377 = vrot.slane %v376, 1
          %v378 = vadd.f32 %v376, %v377
          %v379 = vadd.f32 %v314, %v316
          %v380 = vrot.slane %v379, 4
          %v381 = vadd.f32 %v379, %v380
          %v382 = vrot.slane %v381, 2
          %v383 = vadd.f32 %v381, %v382
          %v384 = vrot.slane %v383, 1
          %v385 = vadd.f32 %v383, %v384
          %v388 = vcombine.low %v378, %v385
          %v390 = vunpack.c.l.s4 1966171168
          %v391 = vunpack.c.0.s8 %v390
          %v392 = vlaneseq
          %v393 = vshrl.u32 %v392, 7
          %v394 = vsub.s32 %v391, %v393
          %v395 = vrot.slane %v388, %v394
          %v397 = vunpack.c.l.s4 1966171168
          %v398 = vunpack.c.0.s8 %v397
          %v399 = vlaneseq
          %v400 = vshrl.u32 %v399, 7
          %v401 = vsub.s32 %v398, %v400
          %v402 = vrot.slane %v395, %v401
          %v404 = vlaneseq
          %vm405 = vcmp.ge.s32.totalorder %v404, 0
          %vm406 = vcmp.lt.s32.totalorder %v404, 256
          %vm407 = vmand %vm405, %vm406
          %408 = vst.msk [vmem:[%s307] sm:$0x3] %vm407, %v402
          %409 = vst [vmem:[%s300] sm:$0x1] 0.0
        $region48: #{tpu_custom_call.1} parent=35 // pred_fallthru
          _
        %p410 = scmp.ne.s32.totalorder %s35, 0
        %s411 = scalar_select %p410, 1, 0
        %s412 = scvt.s32.f32 %s411
        %p413 = scmp.ne.s32.totalorder %s35, 1
        %s414 = scalar_select %p413, 1, 0
        %s415 = scvt.s32.f32 %s414
        %v416 = vld [vmem:[#allocation2] sm:$0xff]
        %v417 = vld [vmem:[#allocation2 + $0x8] sm:$0xff]
        %v418 = vstv %s412
        %v419 = vmul.f32 %v418, %v416
        %v420 = vmul.f32 %v418, %v417
        %s421 = scalar_lea.vmem [#allocation2], 16
        %v422 = vld [vmem:[%s421] sm:$0xff]
        %v423 = vld [vmem:[%s421 + $0x8] sm:$0xff]
        %v424 = vstv %s415
        %v425 = vmul.f32 %v424, %v422
        %v426 = vmul.f32 %v424, %v423
        %v427 = vadd.f32 %v419, %v425
        %v428 = vadd.f32 %v420, %v426
        %s429 = sadd.f32 %s412, %s415
        %v430 = vld [vmem:[%s263] sm:$0xff]
        %v431 = vld [vmem:[%s263 + $0x8] sm:$0xff]
        %v432 = vmul.f32 %v430, 10.0
        %v433 = vmul.f32 %v431, 10.0
        %v434 = vmax.f32 %v432, %v433
        %435 = vmax.xlane.f32.xlu0 %v434
        %v436 = vpop.xlane.xlu0 %435
        %v437 = vsub.f32 %v432, %v436
        %v438 = vsub.f32 %v433, %v436
        %v439 = vmul.f32 %v437, 1.442695
        %v440 = vpow.pop %v439
        %v441 = vmul.f32 %v438, 1.442695
        %v442 = vpow.pop %v441
        %v443 = vadd.f32 %v440, %v442
        %444 = vadd.xlane.f32.xlu0 %v443
        %v445 = vpop.xlane.xlu0 %444
        %v446 = vlog2.pop %v445
        %v447 = vmul.f32 %v446, 0.6931472
        %v448 = vmul.f32 %v427, %v437
        %v449 = vmul.f32 %v428, %v438
        %v450 = vadd.f32 %v448, %v449
        %451 = vadd.xlane.f32.xlu0 %v450
        %v452 = vpop.xlane.xlu0 %451
        %v453 = vstv %s429
        %v454 = vmul.f32 %v453, %v447
        %v455 = vsub.f32 %v454, %v452
        %v456 = vld [vmem:[%s300] sm:$0x1]
        %vm457 = vcmask 7168
        %v458 = vsel %vm457, %v455, 0.0
        %459 = vadd.xlane.f32.xlu0 %v458
        %v460 = vpop.xlane.xlu0 %459
        %v461 = vrot.slane %v460, 4
        %v462 = vadd.f32 %v460, %v461
        %v463 = vrot.slane %v462, 2
        %v464 = vadd.f32 %v462, %v463
        %v465 = vrot.slane %v464, 1
        %v466 = vadd.f32 %v464, %v465
        %s467 = vtos %v466
        %v468 = vstv %s467
        %v469 = vadd.f32 %v456, %v468
        %470 = vst [vmem:[%s300] sm:$0x1] %v469
        %s471 = sand.u32 %s146, 1
        %s472 = scalar_lea.sflag [#allocation6], %s471
        %s473 = sand.u32 %s146, 1
        %s474 = scalar_lea.vmem [#allocation9], %s473
        %s475 = sand.u32 %s172, 1
        %s476 = scalar_lea.sflag [#allocation11], %s475
        %s477 = sand.u32 %s172, 1
        %s478 = smul.addr %s477, 2
        %s479 = scalar_lea.vmem [#allocation10], %s478
        // Predicated region
        $region49: #{tpu_custom_call.1} parent=35 // pred_check
          %p480 = pneg %p156
        $region50: #{tpu_custom_call.1} parent=35 // pred_check_branch
          %482 = sbr.rel (%p480) target = $region52
        $region51: #{tpu_custom_call.1} parent=35 // pred_region
          %s484 = ssub.s32 16, 16
          %485 = vsyncadd %s472, %s484
          %s486 = smul.addr %s34, 16
          %s487 = scalar_lea.hbm %s4, %s486
          %s489 = sshll.u32 %s474, 4
          %s490 = int_to_ptr.vmem [resolvable:$true] %s489
          %492 = dma.vmem_to_hbm [thread:$0]  %s490, 16, %s487, %s472
        $region52: #{tpu_custom_call.1} parent=35 // pred_fallthru
          _
        // Predicated region
        $region53: #{tpu_custom_call.1} parent=35 // pred_check
          %p493 = pneg %p182
        $region54: #{tpu_custom_call.1} parent=35 // pred_check_branch
          %495 = sbr.rel (%p493) target = $region56
        $region55: #{tpu_custom_call.1} parent=35 // pred_region
          %s497 = ssub.s32 32, 32
          %498 = vsyncadd %s476, %s497
          %s499 = smul.addr %s34, 2
          %s500 = smul.addr %s499, 16
          %s501 = scalar_lea.hbm %s5, %s500
          %s503 = sshll.u32 %s479, 4
          %s504 = int_to_ptr.vmem [resolvable:$true] %s503
          %506 = dma.vmem_to_hbm [thread:$0]  %s504, 32, %s501, %s476
        $region56: #{tpu_custom_call.1} parent=35 // pred_fallthru
          _
      $region36: #{tpu_custom_call.1} parent=5 // pred_fallthru
        _
      %p507 = scmp.le.s32.totalorder 2, %s25
      // Predicated region
      $region57: #{tpu_custom_call.1} parent=5 // pred_check
        %p508 = pneg %p507
      $region58: #{tpu_custom_call.1} parent=5 // pred_check_branch
        %510 = sbr.rel (%p508) target = $region60
      $region59: #{tpu_custom_call.1} parent=5 // pred_region
        %s511 = ssub.s32 %s25, 2
        // Predicated region
        $region61: #{tpu_custom_call.1} parent=59 // pred_check
          %p512 = pneg %p162
        $region62: #{tpu_custom_call.1} parent=59 // pred_check_branch
          %514 = sbr.rel (%p512) target = $region64
        $region63: #{tpu_custom_call.1} parent=59 // pred_region
          %s515 = sand.u32 %s147, 1
          %s516 = scalar_lea.sflag [#allocation6], %s515
          %s517 = sand.u32 %s147, 1
          %s518 = scalar_lea.vmem [#allocation9], %s517
          %519 = dma.done %s516, 16
        $region64: #{tpu_custom_call.1} parent=59 // pred_fallthru
          _
        // Predicated region
        $region65: #{tpu_custom_call.1} parent=59 // pred_check
          %p520 = pneg %p188
        $region66: #{tpu_custom_call.1} parent=59 // pred_check_branch
          %522 = sbr.rel (%p520) target = $region68
        $region67: #{tpu_custom_call.1} parent=59 // pred_region
          %s523 = sand.u32 %s173, 1
          %s524 = scalar_lea.sflag [#allocation11], %s523
          %s525 = sand.u32 %s173, 1
          %s526 = smul.addr %s525, 2
          %s527 = scalar_lea.vmem [#allocation10], %s526
          %528 = dma.done %s524, 32
        $region68: #{tpu_custom_call.1} parent=59 // pred_fallthru
          _
      $region60: #{tpu_custom_call.1} parent=5 // pred_fallthru
        _
    $region6: #{tpu_custom_call.1} parent=1 // loop_footer
      %s29 = sadd.s32 1, %s25
    $region7: #{tpu_custom_call.1} parent=1 // loop_footer_branch
      %24 = sbr.rel target = $region3
    $region8: #{tpu_custom_call.1} parent=1 // loop_exit
      _
    %529 = vsyncpa [#allocation5], 1
    %s530 = scalar_lea.sflag [#allocation5], 1
    %531 = vsyncpa %s530, 1
    %532 = vsyncpa [#allocation8], 1
    %s533 = scalar_lea.sflag [#allocation8], 1
    %534 = vsyncpa %s533, 1
    %535 = vsyncpa [#allocation6], 1
    %s536 = scalar_lea.sflag [#allocation6], 1
    %537 = vsyncpa %s536, 1
    %538 = vsyncpa [#allocation11], 1
    %s539 = scalar_lea.sflag [#allocation11], 1
    %540 = vsyncpa %s539, 1

</llo_original>
